<compile_context>
chip_gen: v5e
topology: v5e:2x2
jax: 0.10.0
libtpu: 0.0.40
codegen_flags: <defaults>
</compile_context>

<pallas_src>
import functools

import jax
import jax.numpy as jnp
from jax.experimental import pallas as pl
from jax.experimental.pallas import tpu as pltpu

_LANE = 128
_MiB = 1024 * 1024


def _round_up(x, m):
    return ((x + m - 1) // m) * m


def _detect_hw():
    """Device generation + a conservative VMEM budget (bytes)."""
    kind = ""
    try:
        kind = jax.devices()[0].device_kind.lower()
    except Exception:  # pragma: no cover - defensive
        pass
    is_v7 = "v7" in kind
    try:
        phys = int(pltpu.get_tpu_info().vmem_capacity_bytes)
    except Exception:  # pragma: no cover - defensive
        phys = 64 * _MiB
    budget = max(16 * _MiB, min(int(phys * 0.6), 100 * _MiB))
    if is_v7:
        # 64 MiB physical per TensorCore on v7x -> cap the budget explicitly.
        budget = min(budget, 40 * _MiB)
    return is_v7, budget


_IS_V7, _VMEM_BUDGET = _detect_hw()


def _dim_sem(n_parallel, n_arbitrary):
    """Row axes parallel (CORE_PARALLEL on v7x), reduction axes arbitrary."""
    if _IS_V7:
        par = getattr(pltpu, "CORE_PARALLEL", "parallel")
        arb = getattr(pltpu, "ARBITRARY", "arbitrary")
    else:
        par, arb = "parallel", "arbitrary"
    return tuple([par] * n_parallel + [arb] * n_arbitrary)


# ---------------------------------------------------------------------------
# Kernels
# ---------------------------------------------------------------------------

def _linear_kernel(x_ref, w_ref, o_ref, *, apply_relu):
    # (tm, Cin) @ (Cin, Cpad) on the MXU, f32 accumulate.
    h = jnp.dot(x_ref[...], w_ref[...], preferred_element_type=jnp.float32)
    if apply_relu:  # only used when augment == 0
        h = jnp.maximum(h, 0.0)
    o_ref[...] = h.astype(o_ref.dtype)


def _aug_blocked_kernel(a_ref, h_ref, inv_ref, o_ref, *, apply_relu):
    """One augmentation step, H streamed block-by-block.

    out_rows(i) = ((sum_k A[i,k] @ H[k]) + H[i]) * inv_norm[i]   (ReLU if last)
    The output block index is k-invariant -> o_ref is the accumulator.
    """
    i = pl.program_id(0)
    k = pl.program_id(1)

    @pl.when(k == 0)
    def _():
        o_ref[...] = jnp.zeros_like(o_ref)

    # A is exact 0/1 stored as bf16 (halves HBM traffic); compute in f32.
    o_ref[...] += jnp.dot(a_ref[...].astype(jnp.float32), h_ref[...],
                          preferred_element_type=jnp.float32)

    # "+ H" self-loop: the k-th H block aligns with the output rows exactly
    # when k == i (the wrapper enforces tm == tk).
    @pl.when(k == i)
    def _():
        o_ref[...] += h_ref[...]

    @pl.when(k == pl.num_programs(1) - 1)
    def _():
        r = o_ref[...] * inv_ref[...]
        if apply_relu:
            r = jnp.maximum(r, 0.0)
        o_ref[...] = r


def _aug_resident_kernel(a_ref, h_ref, inv_ref, o_ref, *, apply_relu, tile):
    """Same as above but H is fully resident in VMEM (read from HBM once)."""
    i = pl.program_id(0)
    k = pl.program_id(1)

    @pl.when(k == 0)
    def _():
        o_ref[...] = jnp.zeros_like(o_ref)

    ks = pl.multiple_of(k * tile, tile)
    o_ref[...] += jnp.dot(a_ref[...].astype(jnp.float32),
                          h_ref[pl.ds(ks, tile), :],
                          preferred_element_type=jnp.float32)

    @pl.when(k == pl.num_programs(1) - 1)
    def _():
        js = pl.multiple_of(i * tile, tile)
        r = (o_ref[...] + h_ref[pl.ds(js, tile), :]) * inv_ref[...]
        if apply_relu:
            r = jnp.maximum(r, 0.0)
        o_ref[...] = r


def _fused_kernel(x_ref, w_ref, a_ref, inv_ref, o_ref, h_ref, *, augment):
    """Whole forward in one call: linear + all augmentations + ReLU."""
    h_ref[...] = jnp.dot(x_ref[...], w_ref[...],
                         preferred_element_type=jnp.float32)
    inv = inv_ref[...]
    for _ in range(augment):   # static, small (module default: 1)
        h_ref[...] = (jnp.dot(a_ref[...], h_ref[...],
                              preferred_element_type=jnp.float32)
                      + h_ref[...]) * inv
    o_ref[...] = jnp.maximum(h_ref[...], 0.0)


# ---------------------------------------------------------------------------
# Wrappers
# ---------------------------------------------------------------------------

def _linear(x_p, w_p, *, tm, apply_relu, vmem_limit):
    n_pad, c_in = x_p.shape
    c_pad = w_p.shape[1]
    return pl.pallas_call(
        functools.partial(_linear_kernel, apply_relu=apply_relu),
        out_shape=jax.ShapeDtypeStruct((n_pad, c_pad), jnp.float32),
        grid_spec=pltpu.PrefetchScalarGridSpec(
            num_scalar_prefetch=0,
            grid=(n_pad // tm,),
            in_specs=[
                pl.BlockSpec((tm, c_in), lambda i: (i, 0)),
                pl.BlockSpec((c_in, c_pad), lambda i: (0, 0)),
            ],
            out_specs=pl.BlockSpec((tm, c_pad), lambda i: (i, 0)),
        ),
        compiler_params=pltpu.CompilerParams(
            dimension_semantics=_dim_sem(1, 0),
            vmem_limit_bytes=vmem_limit),
    )(x_p, w_p)


def _adjacency_apply(a_p, h_p, inv_p, *, tile, apply_relu, resident_h,
                     vmem_limit):
    n_pad = a_p.shape[0]
    c_pad = h_p.shape[1]
    grid = (n_pad // tile, n_pad // tile)   # tm == tk (needed for k == i)

    if resident_h:
        kernel = functools.partial(_aug_resident_kernel,
                                   apply_relu=apply_relu, tile=tile)
        h_spec = pl.BlockSpec((n_pad, c_pad), lambda i, k: (0, 0))
    else:
        kernel = functools.partial(_aug_blocked_kernel, apply_relu=apply_relu)
        h_spec = pl.BlockSpec((tile, c_pad), lambda i, k: (k, 0))

    return pl.pallas_call(
        kernel,
        out_shape=jax.ShapeDtypeStruct((n_pad, c_pad), jnp.float32),
        grid_spec=pltpu.PrefetchScalarGridSpec(
            num_scalar_prefetch=0,
            grid=grid,
            in_specs=[
                pl.BlockSpec((tile, tile), lambda i, k: (i, k)),   # A (bf16)
                h_spec,                                            # H
                pl.BlockSpec((tile, 1), lambda i, k: (i, 0)),      # 1/(deg+1)
            ],
            out_specs=pl.BlockSpec((tile, c_pad), lambda i, k: (i, 0)),
        ),
        compiler_params=pltpu.CompilerParams(
            dimension_semantics=_dim_sem(1, 1),
            vmem_limit_bytes=vmem_limit),
    )(a_p, h_p, inv_p)


def _fused_forward(x_p, w_p, a_p, inv_p, *, augment, vmem_limit):
    n_pad, c_in = x_p.shape
    c_pad = w_p.shape[1]
    return pl.pallas_call(
        functools.partial(_fused_kernel, augment=augment),
        out_shape=jax.ShapeDtypeStruct((n_pad, c_pad), jnp.float32),
        grid_spec=pltpu.PrefetchScalarGridSpec(
            num_scalar_prefetch=0,
            grid=(1,),
            in_specs=[
                pl.BlockSpec((n_pad, c_in), lambda i: (0, 0)),
                pl.BlockSpec((c_in, c_pad), lambda i: (0, 0)),
                pl.BlockSpec((n_pad, n_pad), lambda i: (0, 0)),
                pl.BlockSpec((n_pad, 1), lambda i: (0, 0)),
            ],
            out_specs=pl.BlockSpec((n_pad, c_pad), lambda i: (0, 0)),
            scratch_shapes=[pltpu.VMEM((n_pad, c_pad), jnp.float32)],
        ),
        compiler_params=pltpu.CompilerParams(
            dimension_semantics=_dim_sem(0, 1),
            vmem_limit_bytes=vmem_limit),
    )(x_p, w_p, a_p, inv_p)


# ---------------------------------------------------------------------------
# Tiling / path selection
# ---------------------------------------------------------------------------

def _tiled_block_bytes(tile, c_pad):
    # double-buffered: A tile (bf16), H block (f32), lane-padded inv block,
    # plus the k-invariant f32 output block (counted x2 to be safe).
    return (2 * tile * tile * 2
            + 2 * tile * c_pad * 4
            + 2 * tile * _LANE * 4
            + 2 * tile * c_pad * 4)


def _choose_tiling(n, c_pad, budget, node_tile):
    if node_tile is not None:
        tile = int(node_tile)
    else:
        tile = 128
        for cand in (512, 256, 128):   # biggest tile that leaves VMEM headroom
            if _tiled_block_bytes(cand, c_pad) <= budget // 2:
                tile = cand
                break
    if n <= tile:
        n_pad = max(_round_up(n, 8), 8)
        return n_pad, n_pad            # single full-extent block
    return _round_up(n, tile), tile


def gcn_forward(x, w, adj, augment=1, *, node_tile=None, force_path="auto"):
    """x: (N, Cin) f32, w: (Cin, Cout) f32, adj: (N, N) f32 0/1, zero diag."""
    n, c_in = x.shape
    c_out = w.shape[1]
    c_pad = _round_up(max(c_out, 1), _LANE)
    budget = _VMEM_BUDGET
    vmem_limit = budget

    deg = jnp.sum(adj, axis=1, keepdims=True).astype(jnp.float32)
    inv_norm = 1.0 / (deg + 1.0)           # exact reference normalization

    # ---- fused single-call path (everything resident in VMEM) ----
    n_pad_f = max(_round_up(n, 8), 8)
    fused_bytes = (n_pad_f * n_pad_f * 4                 # A (f32, exact)
                   + 3 * n_pad_f * c_pad * 4             # H scratch + out (+slack)
                   + n_pad_f * _LANE * 4                 # inv (lane-padded)
                   + n_pad_f * c_in * 4 + c_in * c_pad * 4)
    if force_path == "fused" or (force_path == "auto"
                                 and 2 * fused_bytes <= budget):
        a_p = jnp.zeros((n_pad_f, n_pad_f), jnp.float32).at[:n, :n].set(adj)
        x_p = jnp.zeros((n_pad_f, c_in), jnp.float32).at[:n, :].set(x)
        w_p = jnp.zeros((c_in, c_pad), jnp.float32).at[:, :c_out].set(w)
        inv_p = jnp.ones((n_pad_f, 1), jnp.float32).at[:n, :].set(inv_norm)
        out = _fused_forward(x_p, w_p, a_p, inv_p, augment=augment,
                             vmem_limit=vmem_limit)
        return out[:n, :c_out]

    # ---- tiled streaming path ----
    n_pad, tile = _choose_tiling(n, c_pad, budget, node_tile)

    # 0/1 adjacency is exactly representable in bf16 -> halves the dominant
    # N^2 HBM read per augmentation.  Zero padding is exact (padded rows/cols
    # of A, X are zero; padded inv rows set to 1 never touch real rows).
    a_p = jnp.zeros((n_pad, n_pad), jnp.bfloat16).at[:n, :n].set(
        adj.astype(jnp.bfloat16))
    x_p = jnp.zeros((n_pad, c_in), jnp.float32).at[:n, :].set(x)
    w_p = jnp.zeros((c_in, c_pad), jnp.float32).at[:, :c_out].set(w)
    inv_p = jnp.ones((n_pad, 1), jnp.float32).at[:n, :].set(inv_norm)

    resident_need = 2 * n_pad * c_pad * 4 + _tiled_block_bytes(tile, c_pad)
    if force_path == "tiled_resident":
        resident_h = True
    elif force_path == "tiled":
        resident_h = False
    else:
        resident_h = resident_need <= budget

    h = _linear(x_p, w_p, tm=tile, apply_relu=(augment == 0),
                vmem_limit=vmem_limit)
    for step in range(augment):
        h = _adjacency_apply(a_p, h, inv_p, tile=tile,
                             apply_relu=(step == augment - 1),
                             resident_h=resident_h,
                             vmem_limit=vmem_limit)
    return h[:n, :c_out]


def gcn_reference(x, w, adj, augment=1):
    # Matches the original module semantics exactly.
    norm = jnp.sum(adj, axis=1, keepdims=True) + 1.0
    h = jnp.dot(x, w, precision=jax.lax.Precision.HIGHEST)
    for _ in range(augment):
        h = (jnp.dot(adj, h, precision=jax.lax.Precision.HIGHEST) + h) / norm
    return jnp.maximum(h, 0.0)


# ---------------------------------------------------------------------------
# Test
# ---------------------------------------------------------------------------

def _make_inputs(key, n, c_in, c_out, p=0.3):
    k_x, k_w, k_a = jax.random.split(key, 3)
    x = jax.random.normal(k_x, (n, c_in), dtype=jnp.float32)
    bound = 1.0 / (c_in ** 0.5)    # nn.Linear(bias=False), kernel as (in, out)
    w = jax.random.uniform(k_w, (c_in, c_out), minval=-bound, maxval=bound,
                           dtype=jnp.float32)
    a = (jax.random.uniform(k_a, (n, n)) < p).astype(jnp.float32)
    adj = jnp.clip(a + a.T, 0.0, 1.0) * (1.0 - jnp.eye(n, dtype=jnp.float32))
    return x, w, adj


if __name__ == "__main__":
    k1, k2 = jax.random.split(jax.random.PRNGKey(0))

    # 1) Small graph -> fused resident path (augment=2 exercises the loop).
    x, w, adj = _make_inputs(k1, 16, 8, 32)
    out = jax.block_until_ready(gcn_forward(x, w, adj, augment=2))
    ref = gcn_reference(x, w, adj, augment=2)
    assert out.shape == (16, 32)
    assert jnp.allclose(out, ref, atol=1e-4, rtol=1e-4), (
        float(jnp.max(jnp.abs(out - ref))))

    # 2) Force the tiled streaming path (blocked H, bf16 A, k-accumulation,
    #    self-loop at k==i, padding of N and Cout).
    x2, w2, adj2 = _make_inputs(k2, 200, 8, 48)
    ref2 = gcn_reference(x2, w2, adj2, augment=2)
    out2 = jax.block_until_ready(
        gcn_forward(x2, w2, adj2, augment=2, node_tile=128,
                    force_path="tiled"))
    assert out2.shape == (200, 48)
    assert jnp.allclose(out2, ref2, atol=1e-3, rtol=1e-3), (
        float(jnp.max(jnp.abs(out2 - ref2))))

    # 3) Force the resident-H tiled path.
    out3 = jax.block_until_ready(
        gcn_forward(x2, w2, adj2, augment=2, node_tile=128,
                    force_path="tiled_resident"))
    assert jnp.allclose(out3, ref2, atol=1e-3, rtol=1e-3), (
        float(jnp.max(jnp.abs(out3 - ref2))))

    # 4) Module default augment=1 via the auto path.
    out4 = jax.block_until_ready(gcn_forward(x, w, adj, augment=1))
    ref4 = gcn_reference(x, w, adj, augment=1)
    assert jnp.allclose(out4, ref4, atol=1e-4, rtol=1e-4), (
        float(jnp.max(jnp.abs(out4 - ref4))))

    print("KERNEL_OK")
</pallas_src>

<mosaic_0001>
module attributes {stable_mosaic.version = 11 : i64} {
  func.func @_fused_kernel(%arg0: i32, %arg1: memref<16x8xf32, #tpu.memory_space<vmem>>, %arg2: memref<8x128xf32, #tpu.memory_space<vmem>>, %arg3: memref<16x16xf32, #tpu.memory_space<vmem>>, %arg4: memref<16x1xf32, #tpu.memory_space<vmem>>, %arg5: memref<16x128xf32, #tpu.memory_space<vmem>>, %arg6: memref<16x128xf32, #tpu.memory_space<vmem>>) attributes {dimension_semantics = [#tpu.dimension_semantics<arbitrary>], iteration_bounds = array<i64: 1>, scalar_prefetch = 0 : i64, scratch_operands = 1 : i64, tpu.core_type = #tpu.core_type<tc>, window_params = [{pipeline_mode = #tpu.pipeline_mode<synchronous>, transform_indices = @transform_0, window_bounds = array<i64: 16, 8>}, {pipeline_mode = #tpu.pipeline_mode<synchronous>, transform_indices = @transform_1, window_bounds = array<i64: 8, 128>}, {pipeline_mode = #tpu.pipeline_mode<synchronous>, transform_indices = @transform_2, window_bounds = array<i64: 16, 16>}, {pipeline_mode = #tpu.pipeline_mode<synchronous>, transform_indices = @transform_3, window_bounds = array<i64: 16, 1>}, {pipeline_mode = #tpu.pipeline_mode<synchronous>, transform_indices = @transform_4, window_bounds = array<i64: 16, 128>}]} {
    %c0 = arith.constant 0 : index
    %c0_0 = arith.constant 0 : index
    %0 = vector.load %arg1[%c0, %c0_0] : memref<16x8xf32, #tpu.memory_space<vmem>>, vector<16x8xf32>
    %c0_1 = arith.constant 0 : index
    %c0_2 = arith.constant 0 : index
    %1 = vector.load %arg2[%c0_1, %c0_2] : memref<8x128xf32, #tpu.memory_space<vmem>>, vector<8x128xf32>
    %cst = arith.constant dense<0.000000e+00> : vector<16x128xf32>
    %2 = tpu.matmul %0, %1, %cst {dimension_numbers = #tpu.dot_dimension_numbers<[1], [0], [0], [1], [0, 0, 1, 1], [], []>} : vector<16x8xf32>, vector<8x128xf32>, vector<16x128xf32> -> vector<16x128xf32>
    %c0_3 = arith.constant 0 : index
    %c0_4 = arith.constant 0 : index
    %3 = vector.load %arg6[%c0_3, %c0_4] : memref<16x128xf32, #tpu.memory_space<vmem>>, vector<16x128xf32>
    tpu.vector_store %arg6[%c0_3, %c0_4], %2 {strides = array<i32>} : memref<16x128xf32, #tpu.memory_space<vmem>>, vector<16x128xf32>,
    %c0_5 = arith.constant 0 : index
    %c0_6 = arith.constant 0 : index
    %4 = vector.load %arg4[%c0_5, %c0_6] : memref<16x1xf32, #tpu.memory_space<vmem>>, vector<16x1xf32>
    %c0_7 = arith.constant 0 : index
    %c0_8 = arith.constant 0 : index
    %5 = vector.load %arg3[%c0_7, %c0_8] : memref<16x16xf32, #tpu.memory_space<vmem>>, vector<16x16xf32>
    %c0_9 = arith.constant 0 : index
    %c0_10 = arith.constant 0 : index
    %6 = vector.load %arg6[%c0_9, %c0_10] : memref<16x128xf32, #tpu.memory_space<vmem>>, vector<16x128xf32>
    %cst_11 = arith.constant dense<0.000000e+00> : vector<16x128xf32>
    %7 = tpu.matmul %5, %6, %cst_11 {dimension_numbers = #tpu.dot_dimension_numbers<[1], [0], [0], [1], [0, 0, 1, 1], [], []>} : vector<16x16xf32>, vector<16x128xf32>, vector<16x128xf32> -> vector<16x128xf32>
    %c0_12 = arith.constant 0 : index
    %c0_13 = arith.constant 0 : index
    %8 = vector.load %arg6[%c0_12, %c0_13] : memref<16x128xf32, #tpu.memory_space<vmem>>, vector<16x128xf32>
    %9 = arith.addf %7, %8 : vector<16x128xf32>
    %10 = vector.broadcast %4 : vector<16x1xf32> to vector<16x128xf32>
    %11 = arith.mulf %9, %10 : vector<16x128xf32>
    %c0_14 = arith.constant 0 : index
    %c0_15 = arith.constant 0 : index
    %12 = vector.load %arg6[%c0_14, %c0_15] : memref<16x128xf32, #tpu.memory_space<vmem>>, vector<16x128xf32>
    tpu.vector_store %arg6[%c0_14, %c0_15], %11 {strides = array<i32>} : memref<16x128xf32, #tpu.memory_space<vmem>>, vector<16x128xf32>,
    %c0_16 = arith.constant 0 : index
    %c0_17 = arith.constant 0 : index
    %13 = vector.load %arg3[%c0_16, %c0_17] : memref<16x16xf32, #tpu.memory_space<vmem>>, vector<16x16xf32>
    %c0_18 = arith.constant 0 : index
    %c0_19 = arith.constant 0 : index
    %14 = vector.load %arg6[%c0_18, %c0_19] : memref<16x128xf32, #tpu.memory_space<vmem>>, vector<16x128xf32>
    %cst_20 = arith.constant dense<0.000000e+00> : vector<16x128xf32>
    %15 = tpu.matmul %13, %14, %cst_20 {dimension_numbers = #tpu.dot_dimension_numbers<[1], [0], [0], [1], [0, 0, 1, 1], [], []>} : vector<16x16xf32>, vector<16x128xf32>, vector<16x128xf32> -> vector<16x128xf32>
    %c0_21 = arith.constant 0 : index
    %c0_22 = arith.constant 0 : index
    %16 = vector.load %arg6[%c0_21, %c0_22] : memref<16x128xf32, #tpu.memory_space<vmem>>, vector<16x128xf32>
    %17 = arith.addf %15, %16 : vector<16x128xf32>
    %18 = vector.broadcast %4 : vector<16x1xf32> to vector<16x128xf32>
    %19 = arith.mulf %17, %18 : vector<16x128xf32>
    %c0_23 = arith.constant 0 : index
    %c0_24 = arith.constant 0 : index
    %20 = vector.load %arg6[%c0_23, %c0_24] : memref<16x128xf32, #tpu.memory_space<vmem>>, vector<16x128xf32>
    tpu.vector_store %arg6[%c0_23, %c0_24], %19 {strides = array<i32>} : memref<16x128xf32, #tpu.memory_space<vmem>>, vector<16x128xf32>,
    %c0_25 = arith.constant 0 : index
    %c0_26 = arith.constant 0 : index
    %21 = vector.load %arg6[%c0_25, %c0_26] : memref<16x128xf32, #tpu.memory_space<vmem>>, vector<16x128xf32>
    %cst_27 = arith.constant 0.000000e+00 : f32
    %22 = vector.broadcast %cst_27 : f32 to vector<16x128xf32>
    %23 = arith.maximumf %21, %22 : vector<16x128xf32>
    %c0_28 = arith.constant 0 : index
    %c0_29 = arith.constant 0 : index
    %24 = vector.load %arg5[%c0_28, %c0_29] : memref<16x128xf32, #tpu.memory_space<vmem>>, vector<16x128xf32>
    tpu.vector_store %arg5[%c0_28, %c0_29], %23 {strides = array<i32>} : memref<16x128xf32, #tpu.memory_space<vmem>>, vector<16x128xf32>,
    return
  }
  func.func @transform_0(%arg0: i32) -> (i32, i32) {
    %c0_i32 = arith.constant 0 : i32
    %c0_i32_0 = arith.constant 0 : i32
    %c0_i32_1 = arith.constant 0 : i32
    return %c0_i32, %c0_i32_0 : i32, i32
  }
  func.func @transform_1(%arg0: i32) -> (i32, i32) {
    %c0_i32 = arith.constant 0 : i32
    %c0_i32_0 = arith.constant 0 : i32
    %c0_i32_1 = arith.constant 0 : i32
    return %c0_i32, %c0_i32_0 : i32, i32
  }
  func.func @transform_2(%arg0: i32) -> (i32, i32) {
    %c0_i32 = arith.constant 0 : i32
    %c0_i32_0 = arith.constant 0 : i32
    %c0_i32_1 = arith.constant 0 : i32
    return %c0_i32, %c0_i32_0 : i32, i32
  }
  func.func @transform_3(%arg0: i32) -> (i32, i32) {
    %c0_i32 = arith.constant 0 : i32
    %c0_i32_0 = arith.constant 0 : i32
    %c0_i32_1 = arith.constant 0 : i32
    return %c0_i32, %c0_i32_0 : i32, i32
  }
  func.func @transform_4(%arg0: i32) -> (i32, i32) {
    %c0_i32 = arith.constant 0 : i32
    %c0_i32_0 = arith.constant 0 : i32
    %c0_i32_1 = arith.constant 0 : i32
    return %c0_i32, %c0_i32_0 : i32, i32
  }
}

</mosaic_0001>

<llo_original>
// kernel: tpu_custom_call.1
$region0: #{tpu_custom_call.1}
  #allocation0 [shape = 'u32[]', space=smem, size = 0x4, offset = 0x4, fixed_abs, tag = 'smem constant byte address 0x4 - core index']
  #allocation1 [shape = 'u32[72,128]{1,0:T(1,128)}', space=vmem, size = 0x9000, scoped, tag = 'internal scratch']
  #allocation2 [shape = 'f32[16,128]{1,0:T(8,128)}', space=vmem, size = 0x2000, scoped, tag = 'scratch operand']
  %s0 = inlined_call_operand.vmem [shape: f32[16,8], index: 0, kind: input, shape index: {}]
  %s1 = inlined_call_operand.vmem [shape: f32[8,128], index: 1, kind: input, shape index: {}]
  %s2 = inlined_call_operand.vmem [shape: f32[16,16], index: 2, kind: input, shape index: {}]
  %s3 = inlined_call_operand.vmem [shape: f32[16,1], index: 3, kind: input, shape index: {}]
  %s4 = inlined_call_operand.hbm [shape: f32[16,128], index: 4, kind: output, shape index: {}]
  %s5 = sld [smem:[#allocation0]]
  $region26: #{tpu_custom_call.1} parent=0
    _
  %s7 = ssub.s32 1, %s5
  %s8 = scalar_select 0, %s7, %s5
  $region1: #{tpu_custom_call.1} parent=0
    #allocation3 [shape = 'u8[8192]{0}', space=vmem, size = 0x2000, scoped, tag = 'output window, operand 0, single buffered']
    #allocation4 [shape = 's32[1]{0}', space=sflag, size = 0x4, scoped, tag = 'scoped memory for tpu_custom_call.1']
    %9 = vsyncpa [#allocation4], 0
    // Predicated region
    $region2: #{tpu_custom_call.1} parent=1 // pred_check
      _
    $region3: #{tpu_custom_call.1} parent=1 // pred_check_branch
      %11 = sbr.rel (0) target = $region5
    $region4: #{tpu_custom_call.1} parent=1 // pred_region
      _
    $region5: #{tpu_custom_call.1} parent=1 // pred_fallthru
      _
    // Predicated region
    $region6: #{tpu_custom_call.1} parent=1 // pred_check
      _
    $region7: #{tpu_custom_call.1} parent=1 // pred_check_branch
      %13 = sbr.rel (0) target = $region9
    $region8: #{tpu_custom_call.1} parent=1 // pred_region
      _
    $region9: #{tpu_custom_call.1} parent=1 // pred_fallthru
      _
    // Predicated region
    $region10: #{tpu_custom_call.1} parent=1 // pred_check
      _
    $region11: #{tpu_custom_call.1} parent=1 // pred_check_branch
      %15 = sbr.rel (0) target = $region13
    $region12: #{tpu_custom_call.1} parent=1 // pred_region
      _
    $region13: #{tpu_custom_call.1} parent=1 // pred_fallthru
      _
    // Predicated region
    $region14: #{tpu_custom_call.1} parent=1 // pred_check
      _
    $region15: #{tpu_custom_call.1} parent=1 // pred_check_branch
      %17 = sbr.rel (0) target = $region17
    $region16: #{tpu_custom_call.1} parent=1 // pred_region
      _
    $region17: #{tpu_custom_call.1} parent=1 // pred_fallthru
      _
    %v18 = vld [vmem:[%s0] sm:$0xff]
    %v19 = vld [vmem:[%s0 + $0x8] sm:$0xff]
    %v20 = vld [vmem:[%s1] sm:$0xff]
    %vm21 = vcmask 64512
    %v23 = vsel %vm21, %v18, 0
    %v26 = vsel %vm21, %v19, 0
    %28 = vmatpush.msra.mxu0 0.0
    %29 = vmatpush.msra.mxu0 0.0
    %30 = vmatpush.msra.mxu0 0.0
    %31 = vmatpush.msra.mxu0 0.0
    %32 = vmatpush.msra.mxu0 0.0
    %33 = vmatpush.msra.mxu0 0.0
    %34 = vmatpush.msra.mxu0 0.0
    %35 = vmatpush.msra.mxu0 0.0
    %36 = vmatpush.msra.mxu0 0.0
    %37 = vmatpush.msra.mxu0 0.0
    %38 = vmatpush.msra.mxu0 0.0
    %39 = vmatpush.msra.mxu0 0.0
    %40 = vmatpush.msra.mxu0 0.0
    %41 = vmatpush.msra.mxu0 0.0
    %42 = vmatpush.msra.mxu0 0.0
    %43 = vmatpush.msra.mxu0 %v20
    %44 = vmatmul.f32.gmra.mxu0 %v23
    %v45 = vpop.f32.mrf.mxu0
    %v46 = vadd.f32 0.0, %v45
    %47 = vmatmul.f32.gmra.mxu0 %v26
    %v48 = vpop.f32.mrf.mxu0
    %v49 = vadd.f32 0.0, %v48
    %50 = vdwg.mxu0
    %51 = vst [vmem:[#allocation2] sm:$0xff] %v46
    %52 = vst [vmem:[#allocation2 + $0x8] sm:$0xff] %v49
    %v53 = vld [vmem:[%s3] sm:$0xff]
    %v54 = vld [vmem:[%s3 + $0x8] sm:$0xff]
    %v55 = vld [vmem:[%s2] sm:$0xff]
    %v56 = vld [vmem:[%s2 + $0x8] sm:$0xff]
    %v57 = vld [vmem:[#allocation2] sm:$0xff]
    %v58 = vld [vmem:[#allocation2 + $0x8] sm:$0xff]
    %vm59 = vcmask 130048
    %v61 = vsel %vm59, %v55, 0
    %v64 = vsel %vm59, %v56, 0
    %66 = vmatpush.msra.mxu0 0.0
    %67 = vmatpush.msra.mxu0 0.0
    %68 = vmatpush.msra.mxu0 0.0
    %69 = vmatpush.msra.mxu0 0.0
    %70 = vmatpush.msra.mxu0 0.0
    %71 = vmatpush.msra.mxu0 0.0
    %72 = vmatpush.msra.mxu0 0.0
    %73 = vmatpush.msra.mxu0 0.0
    %74 = vmatpush.msra.mxu0 0.0
    %75 = vmatpush.msra.mxu0 0.0
    %76 = vmatpush.msra.mxu0 0.0
    %77 = vmatpush.msra.mxu0 0.0
    %78 = vmatpush.msra.mxu0 0.0
    %79 = vmatpush.msra.mxu0 0.0
    %80 = vmatpush.msra.mxu0 %v58
    %81 = vmatpush.msra.mxu0 %v57
    %82 = vmatmul.f32.gmra.mxu0 %v61
    %v83 = vpop.f32.mrf.mxu0
    %v84 = vadd.f32 %v57, %v83
    %85 = vmatmul.f32.gmra.mxu0 %v64
    %v86 = vpop.f32.mrf.mxu0
    %v87 = vadd.f32 %v58, %v86
    %88 = vdwg.mxu0
    %90 = vset.pattern.permute.xlu0 0
    %91 = vperm.xlu0 %90, %v53
    %v92 = vpop.permute.xlu0 %91
    %95 = vset.pattern.permute.xlu0 0
    %96 = vperm.xlu0 %95, %v54
    %v97 = vpop.permute.xlu0 %96
    %v99 = vmul.f32 %v84, %v92
    %v100 = vmul.f32 %v87, %v97
    %101 = vst [vmem:[#allocation2] sm:$0xff] %v99
    %102 = vst [vmem:[#allocation2 + $0x8] sm:$0xff] %v100
    %v103 = vld [vmem:[%s2] sm:$0xff]
    %v104 = vld [vmem:[%s2 + $0x8] sm:$0xff]
    %v105 = vld [vmem:[#allocation2] sm:$0xff]
    %v106 = vld [vmem:[#allocation2 + $0x8] sm:$0xff]
    %v108 = vsel %vm59, %v103, 0
    %v111 = vsel %vm59, %v104, 0
    %113 = vmatpush.msra.mxu0 0.0
    %114 = vmatpush.msra.mxu0 0.0
    %115 = vmatpush.msra.mxu0 0.0
    %116 = vmatpush.msra.mxu0 0.0
    %117 = vmatpush.msra.mxu0 0.0
    %118 = vmatpush.msra.mxu0 0.0
    %119 = vmatpush.msra.mxu0 0.0
    %120 = vmatpush.msra.mxu0 0.0
    %121 = vmatpush.msra.mxu0 0.0
    %122 = vmatpush.msra.mxu0 0.0
    %123 = vmatpush.msra.mxu0 0.0
    %124 = vmatpush.msra.mxu0 0.0
    %125 = vmatpush.msra.mxu0 0.0
    %126 = vmatpush.msra.mxu0 0.0
    %127 = vmatpush.msra.mxu0 %v106
    %128 = vmatpush.msra.mxu0 %v105
    %129 = vmatmul.f32.gmra.mxu0 %v108
    %v130 = vpop.f32.mrf.mxu0
    %v131 = vadd.f32 %v105, %v130
    %132 = vmatmul.f32.gmra.mxu0 %v111
    %v133 = vpop.f32.mrf.mxu0
    %v134 = vadd.f32 %v106, %v133
    %135 = vdwg.mxu0
    %v136 = vmul.f32 %v131, %v92
    %v137 = vmul.f32 %v134, %v97
    %138 = vst [vmem:[#allocation2] sm:$0xff] %v136
    %139 = vst [vmem:[#allocation2 + $0x8] sm:$0xff] %v137
    %v140 = vld [vmem:[#allocation2] sm:$0xff]
    %v141 = vld [vmem:[#allocation2 + $0x8] sm:$0xff]
    %v142 = vmax.f32 %v140, 0.0
    %v143 = vmax.f32 %v141, 0.0
    %144 = vst [vmem:[#allocation3] sm:$0xff] %v142
    %145 = vst [vmem:[#allocation3 + $0x8] sm:$0xff] %v143
    // Predicated region
    $region18: #{tpu_custom_call.1} parent=1 // pred_check
      _
    $region19: #{tpu_custom_call.1} parent=1 // pred_check_branch
      %147 = sbr.rel (0) target = $region21
    $region20: #{tpu_custom_call.1} parent=1 // pred_region
      %149 = vsyncadd [#allocation4], 0
      %s150 = sshll.u32 [#allocation3], 4
      %s151 = int_to_ptr.vmem [resolvable:$true] %s150
      %s152 = sshll.u32 %s4, 4
      %s153 = int_to_ptr.hbm [resolvable:$true] %s152
      %158 = dma.vmem_to_hbm [thread:$0]  %s151, 256, %s153, [#allocation4], 128, 128, 8
    $region21: #{tpu_custom_call.1} parent=1 // pred_fallthru
      _
    // Predicated region
    $region22: #{tpu_custom_call.1} parent=1 // pred_check
      _
    $region23: #{tpu_custom_call.1} parent=1 // pred_check_branch
      %160 = sbr.rel (0) target = $region25
    $region24: #{tpu_custom_call.1} parent=1 // pred_region
      %162 = dma.done [#allocation4], 256
    $region25: #{tpu_custom_call.1} parent=1 // pred_fallthru
      _
    %163 = vsyncpa [#allocation4], 1

</llo_original>
